<compile_context>
chip_gen: v6e
topology: v6e:2x2x1
jax: 0.10.0
libtpu: 0.0.40
codegen_flags: <defaults>
</compile_context>

<pallas_src>
from functools import lru_cache
from heapq import heapify, heappop

import numpy as np
import jax
import jax.numpy as jnp
from jax.experimental import pallas as pl
from jax.experimental.pallas import tpu as pltpu


# ----------------------------------------------------------------------------
# Helpers
# ----------------------------------------------------------------------------
def _round_up(x, m):
    return -(-x // m) * m


def _pow2_bucket(n, minimum):
    return max(minimum, pl.next_power_of_2(max(int(n), 1)))


# ----------------------------------------------------------------------------
# Pallas kernels
# ----------------------------------------------------------------------------
@lru_cache(maxsize=None)
def _sq_mag_call(B, C, Cp, Ep, te):
    """Batched per-edge squared magnitude over a padded (B, Cp, Ep) feature tensor.

    The padded tensor carries a fused ones-row at sublane Cp-1 (used by the rebuild
    kernel); rows >= C are masked out in-register so heap keys remain exact.
    """
    ne = Ep // te

    def kernel(f_ref, o_ref):
        f = f_ref[...]                                         # (Cp, te)
        row = jax.lax.broadcasted_iota(jnp.int32, f.shape, 0)
        f = jnp.where(row < C, f, 0.0)                         # drop ones/pad rows
        o_ref[...] = jnp.sum(f * f, axis=0, keepdims=True)     # (1, te)

    call = pl.pallas_call(
        kernel,
        out_shape=jax.ShapeDtypeStruct((B, 1, Ep), jnp.float32),
        grid_spec=pltpu.PrefetchScalarGridSpec(
            num_scalar_prefetch=0,
            grid=(B, ne),
            in_specs=[pl.BlockSpec((None, Cp, te), lambda b, e: (b, 0, e))],
            out_specs=pl.BlockSpec((None, 1, te), lambda b, e: (b, 0, e))),
        compiler_params=pltpu.CompilerParams(
            dimension_semantics=("parallel", "parallel")),
    )
    return jax.jit(call)


def squared_magnitude_batched(fp, C, E):
    """fp: (B, Cp, Ep) padded device features -> (B, E) numpy float32 of sum_c f^2."""
    B, Cp, Ep = fp.shape
    te = min(Ep, 2048)
    out = _sq_mag_call(B, int(C), Cp, Ep, te)(fp)
    return np.asarray(jax.device_get(out))[:, 0, :E]


def _rebuild_kernel(f_ref, g_ref, o_ref, acc_ref):
    # grid = (batch, T tiles, K/E reduction tiles); reduction axis is last.
    @pl.when(pl.program_id(2) == 0)
    def _init():
        acc_ref[...] = jnp.zeros_like(acc_ref)

    # groups arrive as int8 {0,1}: DMA stream is 1 byte/elem; upcast is cheap VPU work.
    g = g_ref[...].astype(jnp.float32)                     # (tk, tn)
    # Default TPU matmul precision (bf16 passes); groups are exactly 0/1 so only the
    # feature operand is rounded.  Pass precision=HIGHEST for bit-parity if needed.
    acc_ref[...] += jnp.dot(f_ref[...], g,
                            preferred_element_type=jnp.float32)

    @pl.when(pl.program_id(2) == pl.num_programs(2) - 1)
    def _finalize():
        acc = acc_ref[...]                                 # (Cp, tn)
        occ = acc[-1:, :]                                  # fused occurrence counts (ones row)
        # Kept columns have occ >= 1 (exact small integers); padded columns have
        # acc == 0, so dividing by max(occ, 1) reproduces the reference
        # (divide, then zero-pad). approx=False keeps the average exact.
        inv = pl.reciprocal(jnp.maximum(occ, 1.0), approx=False)
        o_ref[...] = acc * inv


@lru_cache(maxsize=None)
def _rebuild_call(B, Cp, Ep, Tp, tk, tn):
    nt, nk = Tp // tn, Ep // tk
    call = pl.pallas_call(
        _rebuild_kernel,
        out_shape=jax.ShapeDtypeStruct((B, Cp, Tp), jnp.float32),
        grid_spec=pltpu.PrefetchScalarGridSpec(
            num_scalar_prefetch=0,
            grid=(B, nt, nk),
            in_specs=[pl.BlockSpec((None, Cp, tk), lambda b, t, k: (b, 0, k)),
                      pl.BlockSpec((None, tk, tn), lambda b, t, k: (b, k, t))],
            out_specs=pl.BlockSpec((None, Cp, tn), lambda b, t, k: (b, 0, t)),
            scratch_shapes=[pltpu.VMEM((Cp, tn), jnp.float32)]),
        compiler_params=pltpu.CompilerParams(
            dimension_semantics=("parallel", "parallel", "arbitrary"),
            vmem_limit_bytes=32 << 20),
    )
    return jax.jit(call)


def rebuild_features_batched(fp, groups_b, C, T):
    """fp: (B, Cp, Ep) padded device features (ones row at Cp-1);
    groups_b: (B, E, T) 0/1 numpy; returns (B, C, T) jnp array."""
    B, Cp, Ep = fp.shape
    _, E, _ = groups_b.shape
    Tp = _pow2_bucket(T, 128)           # pow2 buckets -> one compile per bucket
    tk = min(Ep, 1024)                  # int8 g tile: 1024*512 = 512 KiB, x2 buffers
    tn = min(Tp, 512)                   # lane-dense output tile (>=128)

    # Groups are exactly 0/1 -> int8 is lossless and quarters bytes moved for the
    # dominant (E x T) operand. TODO(synk): for very large meshes exploit groups'
    # sparsity via a scalar-prefetch gather instead of the dense (E x T) matmul.
    gp = np.zeros((B, Ep, Tp), dtype=np.int8)
    gp[:, :E, :T] = groups_b

    out = _rebuild_call(B, Cp, Ep, Tp, tk, tn)(fp, jnp.asarray(gp))
    return out[:, :C, :T]


# ----------------------------------------------------------------------------
# Host-side mesh structures (numpy) — faithful port of the MeshCNN helpers.
# ----------------------------------------------------------------------------
class MeshData:
    pass


def _build_mesh_data(vs, faces):
    d = MeshData()
    d.vs = np.array(vs, dtype=np.float32)
    d.v_mask = np.ones(len(vs), dtype=bool)
    d.ve = [[] for _ in range(len(vs))]
    edge_nb, sides, edges = [], [], []
    edge2key = {}
    nb_count = []
    edges_count = 0
    for face in faces:
        faces_edges = []
        for i in range(3):
            faces_edges.append(tuple(sorted((face[i], face[(i + 1) % 3]))))
        for edge in faces_edges:
            if edge not in edge2key:
                edge2key[edge] = edges_count
                edges.append(list(edge))
                edge_nb.append([-1, -1, -1, -1])
                sides.append([-1, -1, -1, -1])
                d.ve[edge[0]].append(edges_count)
                d.ve[edge[1]].append(edges_count)
                nb_count.append(0)
                edges_count += 1
        for idx, edge in enumerate(faces_edges):
            k = edge2key[edge]
            edge_nb[k][nb_count[k]] = edge2key[faces_edges[(idx + 1) % 3]]
            edge_nb[k][nb_count[k] + 1] = edge2key[faces_edges[(idx + 2) % 3]]
            nb_count[k] += 2
        for idx, edge in enumerate(faces_edges):
            k = edge2key[edge]
            sides[k][nb_count[k] - 2] = nb_count[edge2key[faces_edges[(idx + 1) % 3]]] - 1
            sides[k][nb_count[k] - 1] = nb_count[edge2key[faces_edges[(idx + 2) % 3]]] - 2
    d.edges = np.array(edges, dtype=np.int64)
    d.sides = np.array(sides, dtype=np.int64)
    d.edges_count = edges_count
    gemm = np.array(edge_nb, dtype=np.int64)
    ei = np.empty((2, 5 * edges_count), dtype=np.int64)
    for e in range(edges_count):
        ei[0, 5 * e] = e
        ei[0, 5 * e + 1:5 * e + 5] = gemm[e]
        ei[1, 5 * e:5 * e + 5] = e
    d.edge_index = ei
    return d


class Mesh:
    def __init__(self, vs, faces):
        self.mesh_data = _build_mesh_data(vs, faces)

    def merge_vertices(self, edge_id):
        d = self.mesh_data
        self.remove_edge(edge_id)
        edge = d.edges[edge_id]
        v_a = d.vs[int(edge[0])]
        v_b = d.vs[int(edge[1])]
        v_a += v_b
        v_a /= 2
        d.v_mask[int(edge[1])] = False
        mask = d.edges == edge[1]
        d.ve[int(edge[0])].extend(d.ve[int(edge[1])])
        d.edges[mask] = edge[0]

    def remove_vertex(self, v):
        self.mesh_data.v_mask[int(v)] = False

    def remove_edge(self, edge_id):
        d = self.mesh_data
        for v in d.edges[edge_id]:
            if edge_id in d.ve[int(v)]:
                d.ve[int(v)].remove(edge_id)

    def clean(self, edges_mask, groups):
        d = self.mesh_data
        edges_mask = edges_mask.astype(bool)
        gemm = d.edge_index[0].reshape(-1, 5)[:, 1:]
        gemm = gemm[edges_mask]
        d.edges = d.edges[edges_mask]
        d.sides = d.sides[edges_mask]
        em = np.concatenate([edges_mask, [False]])
        new_idx = np.zeros(em.shape[0], dtype=np.int64)
        new_idx[-1] = -1
        new_idx[em] = np.arange(int(em.sum()))
        gemm = new_idx[gemm]
        d.ve = [[int(new_idx[e]) for e in ve] for ve in d.ve]
        e_new = gemm.shape[0]
        ei = np.empty((2, 5 * e_new), dtype=np.int64)
        for e in range(e_new):
            ei[0, 5 * e] = e
            ei[0, 5 * e + 1:5 * e + 5] = gemm[e]
            ei[1, 5 * e:5 * e + 5] = e
        d.edge_index = ei
        d.edges_count = e_new

    def union_groups(self, source, target):
        pass

    def remove_group(self, index):
        pass


class MeshUnion:
    def __init__(self, n):
        self.__size = n
        self.groups = np.eye(n, dtype=np.float32)

    def union(self, source, target):
        self.groups[int(target), :] += self.groups[int(source), :]

    def remove_group(self, index):
        return

    def prepare_groups(self, mask, num_edges, target_edges):
        """prepare_groups: clamp(select rows by mask).T, zero-padded to (E, T) int8."""
        g = (self.groups[mask.astype(bool), :] > 0.5).T          # (E_orig, num_kept)
        out = np.zeros((num_edges, target_edges), dtype=np.int8)
        rows = min(num_edges, g.shape[0])
        cols = min(target_edges, g.shape[1])
        out[:rows, :cols] = g[:rows, :cols]
        return out


def get_meshes_edge_index(meshes):
    # TODO(synk): get_meshes_edge_index is external to the reference module; we
    # approximate it by concatenating the cleaned per-mesh edge_index with offsets.
    out, offset = [], 0
    for mesh in meshes:
        ei = mesh.mesh_data.edge_index.copy()
        ei = np.where(ei >= 0, ei + offset, ei)
        out.append(ei)
        offset += mesh.mesh_data.edges_count
    return np.concatenate(out, axis=1)


# ----------------------------------------------------------------------------
# MeshPool — faithful port of the reference control flow.
# ----------------------------------------------------------------------------
class MeshPool:
    def __init__(self, target_resolution, multi_thread=False):
        self.__out_target = target_resolution
        self.__merge_edges = [-1, -1]

    def __call__(self, fe, meshes):
        B, C, E = fe.shape
        T = self.__out_target

        # Padded feature tensor built & transferred ONCE; reused by both kernels.
        # Row Cp-1 is a fused ones-row over the real edge columns so occurrence
        # counts fall out of the same matmul as the feature sums.
        Cp = _round_up(C + 1, 8)
        Ep = _pow2_bucket(E, 128)
        fp = jnp.zeros((B, Cp, Ep), jnp.float32)
        fp = fp.at[:, :C, :E].set(jnp.asarray(fe, dtype=jnp.float32))
        fp = fp.at[:, Cp - 1, :E].set(1.0)

        # Single batched Pallas launch for all meshes' heap keys.
        sq = squared_magnitude_batched(fp, C, E)

        # Host-side sequential edge collapses (data-dependent; no Pallas equivalent).
        groups_b = np.zeros((B, E, T), dtype=np.int8)
        for mesh_index in range(len(meshes)):
            mask, edge_groups = self.__pool_main(meshes[mesh_index],
                                                 sq[mesh_index])
            groups_b[mesh_index] = edge_groups.prepare_groups(mask, E, T)

        # Single batched Pallas launch for the feature rebuild of all meshes.
        out_features = rebuild_features_batched(fp, groups_b, C, T)   # (B, C, T)
        out_features = out_features.reshape(len(meshes), -1, T)
        out_edge_index = get_meshes_edge_index(meshes)
        return out_features, out_edge_index

    def __pool_main(self, mesh, sq_full):
        ec = mesh.mesh_data.edges_count
        sq = sq_full[:ec]
        heap = [[float(sq[i]), float(i)] for i in range(ec)]
        heapify(heap)
        mask = np.ones(ec, dtype=bool)
        edge_groups = MeshUnion(ec)
        while mesh.mesh_data.edges_count > self.__out_target:
            value, edge_id = heappop(heap)
            edge_id = int(edge_id)
            if mask[edge_id]:
                self.__pool_edge(mesh, edge_id, mask, edge_groups)
        mesh.clean(mask, edge_groups)
        return mask, edge_groups

    def __pool_edge(self, mesh, edge_id, mask, edge_groups):
        if self.has_boundaries(mesh.mesh_data, edge_id):
            return False
        elif (self.__clean_side(mesh, edge_id, mask, edge_groups, 0)
              and self.__clean_side(mesh, edge_id, mask, edge_groups, 2)
              and self.__is_one_ring_valid(mesh.mesh_data, edge_id)):
            self.__merge_edges[0] = self.__pool_side(mesh, edge_id, mask, edge_groups, 0)
            self.__merge_edges[1] = self.__pool_side(mesh, edge_id, mask, edge_groups, 2)
            mesh.merge_vertices(edge_id)
            mask[edge_id] = False
            MeshPool.__remove_group(mesh, edge_groups, edge_id)
            mesh.mesh_data.edges_count -= 1
            return True
        return False

    def __clean_side(self, mesh, edge_id, mask, edge_groups, side):
        if mesh.mesh_data.edges_count <= self.__out_target:
            return False
        invalid_edges = MeshPool.__get_invalids(mesh, edge_id, edge_groups, side)
        while len(invalid_edges) != 0 and mesh.mesh_data.edges_count > self.__out_target:
            self.__remove_triplete(mesh, mask, edge_groups, invalid_edges)
            if mesh.mesh_data.edges_count <= self.__out_target:
                return False
            if self.has_boundaries(mesh.mesh_data, edge_id):
                return False
            invalid_edges = MeshPool.__get_invalids(mesh, edge_id, edge_groups, side)
        return True

    @staticmethod
    def has_boundaries(mesh_data, edge_id):
        edge_id_pyg = edge_id * 5
        for edge in mesh_data.edge_index[0, edge_id_pyg + 1:edge_id_pyg + 5]:
            if edge == -1 or -1 in mesh_data.edge_index[0, 5 * edge + 1:5 * edge + 5]:
                return True
        return False

    @staticmethod
    def __is_one_ring_valid(mesh_data, edge_id):
        v_a = set(np.array(mesh_data.edges[
            np.array(mesh_data.ve[int(mesh_data.edges[edge_id, 0])])]).reshape(-1))
        v_b = set(np.array(mesh_data.edges[
            np.array(mesh_data.ve[int(mesh_data.edges[edge_id, 1])])]).reshape(-1))
        shared = v_a & v_b - set(np.array(mesh_data.edges[edge_id]))
        return len(shared) == 2

    def __pool_side(self, mesh, edge_id, mask, edge_groups, side):
        info = MeshPool.__get_face_info(mesh.mesh_data, edge_id, side)
        key_a, key_b, side_a, side_b, _, other_side_b, _, other_keys_b = info
        self.__redirect_edges(mesh.mesh_data, key_a, side_a - side_a % 2,
                              other_keys_b[0], mesh.mesh_data.sides[key_b, other_side_b])
        self.__redirect_edges(mesh.mesh_data, key_a, side_a - side_a % 2 + 1,
                              other_keys_b[1], mesh.mesh_data.sides[key_b, other_side_b + 1])
        MeshPool.__union_groups(mesh, edge_groups, key_b, key_a)
        MeshPool.__union_groups(mesh, edge_groups, edge_id, key_a)
        mask[key_b] = False
        MeshPool.__remove_group(mesh, edge_groups, key_b)
        mesh.remove_edge(key_b)
        mesh.mesh_data.edges_count -= 1
        return key_a

    @staticmethod
    def __get_invalids(mesh, edge_id, edge_groups, side):
        info = MeshPool.__get_face_info(mesh.mesh_data, edge_id, side)
        key_a, key_b, side_a, side_b, other_side_a, other_side_b, other_keys_a, other_keys_b = info
        shared_items = MeshPool.__get_shared_items(other_keys_a, other_keys_b)
        if len(shared_items) == 0:
            return []
        assert len(shared_items) == 2
        middle_edge = other_keys_a[shared_items[0]]
        update_key_a = other_keys_a[1 - shared_items[0]]
        update_key_b = other_keys_b[1 - shared_items[1]]
        update_side_a = mesh.mesh_data.sides[key_a, other_side_a + 1 - shared_items[0]]
        update_side_b = mesh.mesh_data.sides[key_b, other_side_b + 1 - shared_items[1]]
        MeshPool.__redirect_edges(mesh.mesh_data, edge_id, side, update_key_a, update_side_a)
        MeshPool.__redirect_edges(mesh.mesh_data, edge_id, side + 1, update_key_b, update_side_b)
        MeshPool.__redirect_edges(mesh.mesh_data, update_key_a,
                                  MeshPool.__get_other_side(update_side_a),
                                  update_key_b, MeshPool.__get_other_side(update_side_b))
        MeshPool.__union_groups(mesh, edge_groups, key_a, edge_id)
        MeshPool.__union_groups(mesh, edge_groups, key_b, edge_id)
        MeshPool.__union_groups(mesh, edge_groups, key_a, update_key_a)
        MeshPool.__union_groups(mesh, edge_groups, middle_edge, update_key_a)
        MeshPool.__union_groups(mesh, edge_groups, key_b, update_key_b)
        MeshPool.__union_groups(mesh, edge_groups, middle_edge, update_key_b)
        return [key_a, key_b, middle_edge]

    @staticmethod
    def __redirect_edges(mesh_data, edge_a_key, side_a, edge_b_key, side_b):
        mesh_data.edge_index[0, 5 * edge_a_key + 1 + side_a] = edge_b_key
        mesh_data.edge_index[0, 5 * edge_b_key + 1 + side_b] = edge_a_key
        mesh_data.sides[edge_a_key, side_a] = side_b
        mesh_data.sides[edge_b_key, side_b] = side_a

    @staticmethod
    def __get_shared_items(list_a, list_b):
        shared = []
        for i in range(len(list_a)):
            for j in range(len(list_b)):
                if list_a[i] == list_b[j]:
                    shared.extend([i, j])
        return shared

    @staticmethod
    def __get_other_side(side):
        return side + 1 - 2 * (side % 2)

    @staticmethod
    def __get_face_info(mesh_data, edge_id, side):
        edge_id_pyg = 5 * edge_id
        key_a = int(mesh_data.edge_index[0, edge_id_pyg + 1 + side])
        key_b = int(mesh_data.edge_index[0, edge_id_pyg + 1 + side + 1])
        side_a = int(mesh_data.sides[edge_id, side])
        side_b = int(mesh_data.sides[edge_id, side + 1])
        other_side_a = (side_a - side_a % 2 + 2) % 4
        other_side_b = (side_b - side_b % 2 + 2) % 4
        other_keys_a = [int(mesh_data.edge_index[0, key_a * 5 + 1 + other_side_a]),
                        int(mesh_data.edge_index[0, key_a * 5 + 1 + other_side_a + 1])]
        other_keys_b = [int(mesh_data.edge_index[0, key_b * 5 + 1 + other_side_b]),
                        int(mesh_data.edge_index[0, key_b * 5 + 1 + other_side_b + 1])]
        return key_a, key_b, side_a, side_b, other_side_a, other_side_b, other_keys_a, other_keys_b

    @staticmethod
    def __remove_triplete(mesh, mask, edge_groups, invalid_edges):
        vertex = set(np.array(mesh.mesh_data.edges[invalid_edges[0]]))
        for edge_key in invalid_edges:
            vertex &= set(np.array(mesh.mesh_data.edges[edge_key]))
            mask[edge_key] = False
            MeshPool.__remove_group(mesh, edge_groups, edge_key)
        mesh.mesh_data.edges_count -= 3
        vertex = list(vertex)
        assert len(vertex) == 1
        mesh.remove_vertex(vertex[0])

    @staticmethod
    def __union_groups(mesh, edge_groups, source, target):
        edge_groups.union(source, target)
        mesh.union_groups(source, target)

    @staticmethod
    def __remove_group(mesh, edge_groups, index):
        edge_groups.remove_group(index)
        mesh.remove_group(index)


# ----------------------------------------------------------------------------
# Example: two icosahedra (closed meshes: 12 verts, 30 edges, 20 faces).
# ----------------------------------------------------------------------------
def make_icosahedron_mesh():
    t = (1.0 + np.sqrt(5.0)) / 2.0
    vs = [(-1, t, 0), (1, t, 0), (-1, -t, 0), (1, -t, 0),
          (0, -1, t), (0, 1, t), (0, -1, -t), (0, 1, -t),
          (t, 0, -1), (t, 0, 1), (-t, 0, -1), (-t, 0, 1)]
    faces = [(0, 11, 5), (0, 5, 1), (0, 1, 7), (0, 7, 10), (0, 10, 11),
             (1, 5, 9), (5, 11, 4), (11, 10, 2), (10, 7, 6), (7, 1, 8),
             (3, 9, 4), (3, 4, 2), (3, 2, 6), (3, 6, 8), (3, 8, 9),
             (4, 9, 5), (2, 4, 11), (6, 2, 10), (8, 6, 7), (9, 8, 1)]
    return Mesh(vs, faces)


if __name__ == "__main__":
    meshes = [make_icosahedron_mesh(), make_icosahedron_mesh()]
    num_edges = meshes[0].mesh_data.edges_count      # 30
    channels = 4
    target_resolution = 24

    key = jax.random.PRNGKey(0)
    fe = jax.random.normal(key, (len(meshes), channels, num_edges), dtype=jnp.float32)

    pool = MeshPool(target_resolution)
    out_features, out_edge_index = pool(fe, meshes)
    out_features = jax.block_until_ready(out_features)

    assert out_features.shape == (len(meshes), channels, target_resolution)
    assert np.all(np.isfinite(np.asarray(out_features)))
    print("KERNEL_OK")
</pallas_src>

<mosaic_0001>
module attributes {stable_mosaic.version = 11 : i64} {
  func.func @kernel(%arg0: i32, %arg1: i32, %arg2: memref<1x8x128xf32, #tpu.memory_space<vmem>>, %arg3: memref<1x1x128xf32, #tpu.memory_space<vmem>>) attributes {dimension_semantics = [#tpu.dimension_semantics<parallel>, #tpu.dimension_semantics<parallel>], iteration_bounds = array<i64: 2, 1>, scalar_prefetch = 0 : i64, scratch_operands = 0 : i64, tpu.core_type = #tpu.core_type<tc>, window_params = [{transform_indices = @transform_0, window_bounds = array<i64: 1, 8, 128>}, {transform_indices = @transform_1, window_bounds = array<i64: 1, 1, 128>}]} {
    %c0 = arith.constant 0 : index
    %c0_0 = arith.constant 0 : index
    %c0_1 = arith.constant 0 : index
    %0 = vector.load %arg2[%c0, %c0_0, %c0_1] : memref<1x8x128xf32, #tpu.memory_space<vmem>>, vector<1x8x128xf32>
    %1 = vector.shape_cast %0 : vector<1x8x128xf32> to vector<8x128xf32>
    %2 = tpu.iota {dimensions = array<i32: 0>} : vector<8x128xi32>
    %c4_i32 = arith.constant 4 : i32
    %3 = vector.broadcast %c4_i32 : i32 to vector<8x128xi32>
    %4 = arith.cmpi slt, %2, %3 : vector<8x128xi32>
    %cst = arith.constant 0.000000e+00 : f32
    %5 = vector.broadcast %cst : f32 to vector<8x128xf32>
    %6 = arith.select %4, %1, %5 : vector<8x128xi1>, vector<8x128xf32>
    %7 = arith.mulf %6, %6 : vector<8x128xf32>
    %cst_2 = arith.constant dense<0.000000e+00> : vector<128xf32>
    %8 = vector.multi_reduction <add>, %7, %cst_2 [0] : vector<8x128xf32> to vector<128xf32>
    %9 = vector.shape_cast %8 : vector<128xf32> to vector<1x128xf32>
    %c0_3 = arith.constant 0 : index
    %c0_4 = arith.constant 0 : index
    %c0_5 = arith.constant 0 : index
    %10 = vector.load %arg3[%c0_3, %c0_4, %c0_5] : memref<1x1x128xf32, #tpu.memory_space<vmem>>, vector<1x1x128xf32>
    %11 = vector.shape_cast %10 : vector<1x1x128xf32> to vector<1x128xf32>
    %12 = vector.shape_cast %9 : vector<1x128xf32> to vector<1x1x128xf32>
    tpu.vector_store %arg3[%c0_3, %c0_4, %c0_5], %12 {strides = array<i32>} : memref<1x1x128xf32, #tpu.memory_space<vmem>>, vector<1x1x128xf32>,
    return
  }
  func.func @transform_0(%arg0: i32, %arg1: i32) -> (i32, i32, i32) {
    %c0_i32 = arith.constant 0 : i32
    %c0_i32_0 = arith.constant 0 : i32
    return %arg0, %c0_i32, %arg1 : i32, i32, i32
  }
  func.func @transform_1(%arg0: i32, %arg1: i32) -> (i32, i32, i32) {
    %c0_i32 = arith.constant 0 : i32
    %c0_i32_0 = arith.constant 0 : i32
    return %arg0, %c0_i32, %arg1 : i32, i32, i32
  }
}

</mosaic_0001>

<llo_original>
// kernel: tpu_custom_call.1
$region0: #{tpu_custom_call.1}
  #allocation0 [shape = 'u32[]', space=smem, size = 0x4, offset = 0x4, fixed_abs, tag = 'smem constant byte address 0x4 - core index']
  #allocation1 [shape = 'u32[144,128]{1,0:T(1,128)}', space=vmem, size = 0x12000, scoped, tag = 'internal scratch']
  %s0 = inlined_call_operand.hbm [shape: f32[2,8,128], index: 0, kind: input, shape index: {}]
  %s1 = inlined_call_operand.hbm [shape: f32[2,1,128], index: 1, kind: output, shape index: {}]
  %s2 = sld [smem:[#allocation0]]
  $region41: #{tpu_custom_call.1} parent=0
    _
  %s4 = ssub.s32 1, %s2
  %s5 = scalar_select 0, %s4, %s2
  $region1: #{tpu_custom_call.1} parent=0
    #allocation2 [shape = 'u8[8192]{0}', space=vmem, size = 0x2000, scoped, tag = 'input window, operand 0']
    #allocation3 [shape = 's32[2]{0}', space=sflag, size = 0x8, scoped, tag = 'scoped memory for tpu_custom_call.1']
    #allocation4 [shape = 's32[2]{0}', space=sflag, size = 0x8, scoped, tag = 'scoped memory for tpu_custom_call.1']
    #allocation5 [shape = 'u8[1024]{0}', space=vmem, size = 0x400, scoped, tag = 'output window, operand 0']
    %6 = vsyncpa [#allocation3], 0
    %s7 = scalar_lea.sflag [#allocation3], 1
    %8 = vsyncpa %s7, 0
    %9 = vsyncpa [#allocation4], 0
    %s10 = scalar_lea.sflag [#allocation4], 1
    %11 = vsyncpa %s10, 0
    loop: start=0, step=1, limit=4
    $region2: #{tpu_custom_call.1} parent=1 // loop_pre_header
      _
    $region3: #{tpu_custom_call.1} parent=1 // loop_header
      %s13 = sphi 0, %s17
      %p14 = scmp.ge.s32.totalorder %s13, 4
      %s20 = sphi 0, %s32
      %s21 = sphi 0, %s28
      %s22 = sphi 0, %s20
      %s23 = sphi 0, %s21
      %s24 = sphi 0, %s22
      %s25 = sphi 0, %s23
      %s37 = sphi 0, %s39
      %s40 = sphi 0, %s37
      %s41 = sphi 0, %s40
      %s57 = sphi 0, %s41
      %s65 = sphi 0, %s67
      %s68 = sphi 0, %s65
      %s69 = sphi 0, %s68
      %s85 = sphi 0, %s69
    $region4: #{tpu_custom_call.1} parent=1 // loop_header_branch
      %16 = sbr.rel (%p14) target = $region8
    $region5: #{tpu_custom_call.1} parent=1 // loop_body
      %s18 = ssub.s32 %s13, 1
      %s19 = ssub.s32 %s13, 2
      %s26 = sadd.s32 1, %s21
      %p27 = scmp.ge.s32.totalorder %s26, 1
      %s28 = scalar_select %p27, 0, %s26
      %s29 = sadd.s32 1, %s20
      %s30 = scalar_select %p27, %s29, %s20
      %p31 = scmp.ge.s32.totalorder %s30, 2
      %s32 = scalar_select %p31, 0, %s30
      %s33 = ssub.s32 %s20, %s32
      %s34 = ssub.s32 %s21, %s28
      %s35 = sor.u32 %s33, %s34
      %p36 = scmp.eq.s32.totalorder %s35, 0
      %s38 = sadd.s32 %s37, 1
      %s39 = scalar_select %p36, %s37, %s38
      %p42 = pneg %p36
      %p43 = scmp.eq.s32.totalorder %s13, 1
      %p44 = por %p42, %p43
      %p45 = scmp.ne.s32.totalorder %s37, %s40
      %p46 = scmp.eq.s32.totalorder %s13, 0
      %p47 = por %p45, %p46
      %p48 = scmp.ne.s32.totalorder %s37, %s40
      %p49 = scmp.eq.s32.totalorder %s18, 1
      %p50 = por %p48, %p49
      %p51 = scmp.ne.s32.totalorder %s40, %s41
      %p52 = scmp.eq.s32.totalorder %s18, 0
      %p53 = por %p51, %p52
      %p54 = scmp.ne.s32.totalorder %s40, %s41
      %p55 = scmp.eq.s32.totalorder %s19, 1
      %p56 = por %p54, %p55
      %p58 = scmp.ne.s32.totalorder %s41, %s57
      %p59 = scmp.eq.s32.totalorder %s19, 0
      %p60 = por %p58, %p59
      %s61 = ssub.s32 %s20, %s32
      %s62 = ssub.s32 %s21, %s28
      %s63 = sor.u32 %s61, %s62
      %p64 = scmp.eq.s32.totalorder %s63, 0
      %s66 = sadd.s32 %s65, 1
      %s67 = scalar_select %p64, %s65, %s66
      %p70 = pneg %p64
      %p71 = scmp.eq.s32.totalorder %s13, 1
      %p72 = por %p70, %p71
      %p73 = scmp.ne.s32.totalorder %s65, %s68
      %p74 = scmp.eq.s32.totalorder %s13, 0
      %p75 = por %p73, %p74
      %p76 = scmp.ne.s32.totalorder %s65, %s68
      %p77 = scmp.eq.s32.totalorder %s18, 1
      %p78 = por %p76, %p77
      %p79 = scmp.ne.s32.totalorder %s68, %s69
      %p80 = scmp.eq.s32.totalorder %s18, 0
      %p81 = por %p79, %p80
      %p82 = scmp.ne.s32.totalorder %s68, %s69
      %p83 = scmp.eq.s32.totalorder %s19, 1
      %p84 = por %p82, %p83
      %p86 = scmp.ne.s32.totalorder %s69, %s85
      %p87 = scmp.eq.s32.totalorder %s19, 0
      %p88 = por %p86, %p87
      %p89 = scmp.le.s32.totalorder 1, %s13
      %p90 = scmp.lt.s32.totalorder %s13, 3
      %p91 = pnand %p89, %p90
      %p92 = pneg %p91
      // Predicated region
      $region9: #{tpu_custom_call.1} parent=5 // pred_check
        _
      $region10: #{tpu_custom_call.1} parent=5 // pred_check_branch
        %94 = sbr.rel (%p91) target = $region12
      $region11: #{tpu_custom_call.1} parent=5 // pred_region
        %s95 = ssub.s32 %s13, 1
      $region12: #{tpu_custom_call.1} parent=5 // pred_fallthru
        _
      %p96 = scmp.lt.s32.totalorder %s13, 2
      // Predicated region
      $region13: #{tpu_custom_call.1} parent=5 // pred_check
        %p97 = pneg %p96
      $region14: #{tpu_custom_call.1} parent=5 // pred_check_branch
        %99 = sbr.rel (%p97) target = $region16
      $region15: #{tpu_custom_call.1} parent=5 // pred_region
        // Predicated region
        $region17: #{tpu_custom_call.1} parent=15 // pred_check
          %p100 = pneg %p47
        $region18: #{tpu_custom_call.1} parent=15 // pred_check_branch
          %102 = sbr.rel (%p100) target = $region20
        $region19: #{tpu_custom_call.1} parent=15 // pred_region
          %s103 = sand.u32 %s37, 1
          %s104 = scalar_lea.sflag [#allocation3], %s103
          %s105 = sand.u32 %s37, 1
          %s106 = smul.addr %s105, 8
          %s107 = scalar_lea.vmem [#allocation2], %s106
          %s109 = ssub.s32 128, 128
          %110 = vsyncadd %s104, %s109
          %s111 = sadd.s32 %s21, %s20
          %s112 = smul.addr %s111, 128
          %s113 = scalar_lea.hbm %s0, %s112
          %s115 = sshll.u32 %s107, 4
          %s116 = int_to_ptr.vmem [resolvable:$true] %s115
          %118 = dma.hbm_to_vmem [thread:$0]  %s113, 128, %s116, %s104
        $region20: #{tpu_custom_call.1} parent=15 // pred_fallthru
          _
      $region16: #{tpu_custom_call.1} parent=5 // pred_fallthru
        _
      %p119 = scmp.le.s32.totalorder 1, %s13
      %p120 = scmp.lt.s32.totalorder %s13, 3
      %p121 = pnand %p119, %p120
      %p122 = pneg %p121
      // Predicated region
      $region21: #{tpu_custom_call.1} parent=5 // pred_check
        _
      $region22: #{tpu_custom_call.1} parent=5 // pred_check_branch
        %124 = sbr.rel (%p121) target = $region24
      $region23: #{tpu_custom_call.1} parent=5 // pred_region
        %s125 = ssub.s32 %s13, 1
        %s126 = sand.u32 %s40, 1
        %s127 = scalar_lea.sflag [#allocation3], %s126
        %s128 = sand.u32 %s40, 1
        %s129 = smul.addr %s128, 8
        %s130 = scalar_lea.vmem [#allocation2], %s129
        // Predicated region
        $region25: #{tpu_custom_call.1} parent=23 // pred_check
          %p131 = pneg %p53
        $region26: #{tpu_custom_call.1} parent=23 // pred_check_branch
          %133 = sbr.rel (%p131) target = $region28
        $region27: #{tpu_custom_call.1} parent=23 // pred_region
          %134 = dma.done %s127, 128
        $region28: #{tpu_custom_call.1} parent=23 // pred_fallthru
          _
        %s135 = sand.u32 %s40, 1
        %s136 = scalar_lea.sflag [#allocation3], %s135
        %s137 = sand.u32 %s40, 1
        %s138 = smul.addr %s137, 8
        %s139 = scalar_lea.vmem [#allocation2], %s138
        %p140 = pneg %p53
        %p141 = pneg %p50
        %p142 = pneg %p81
        %p143 = pneg %p78
        %s144 = sand.u32 %s68, 1
        %s145 = scalar_lea.sflag [#allocation4], %s144
        %s146 = sand.u32 %s68, 1
        %s147 = scalar_lea.vmem [#allocation5], %s146
        %v148 = vld [vmem:[%s130] sm:$0xff]
        %v149 = vlaneseq
        %v150 = vshrl.u32 %v149, 7
        %vm151 = vcmp.lt.s32.totalorder %v150, 4
        %v152 = vsel %vm151, %v148, 0.0
        %v153 = vmul.f32 %v152, %v152
        %v154 = vrot.slane %v153, 4
        %v155 = vadd.f32 %v153, %v154
        %v156 = vrot.slane %v155, 2
        %v157 = vadd.f32 %v155, %v156
        %v158 = vrot.slane %v157, 1
        %v159 = vadd.f32 %v157, %v158
        %160 = vst [vmem:[%s147] sm:$0x1] %v159
        %s161 = sand.u32 %s68, 1
        %s162 = scalar_lea.sflag [#allocation4], %s161
        %s163 = sand.u32 %s68, 1
        %s164 = scalar_lea.vmem [#allocation5], %s163
        // Predicated region
        $region29: #{tpu_custom_call.1} parent=23 // pred_check
          %p165 = pneg %p78
        $region30: #{tpu_custom_call.1} parent=23 // pred_check_branch
          %167 = sbr.rel (%p165) target = $region32
        $region31: #{tpu_custom_call.1} parent=23 // pred_region
          %s169 = ssub.s32 16, 16
          %170 = vsyncadd %s162, %s169
          %s171 = sadd.s32 %s23, %s22
          %s172 = smul.addr %s171, 16
          %s173 = scalar_lea.hbm %s1, %s172
          %s175 = sshll.u32 %s164, 4
          %s176 = int_to_ptr.vmem [resolvable:$true] %s175
          %178 = dma.vmem_to_hbm [thread:$0]  %s176, 16, %s173, %s162
        $region32: #{tpu_custom_call.1} parent=23 // pred_fallthru
          _
      $region24: #{tpu_custom_call.1} parent=5 // pred_fallthru
        _
      %p179 = scmp.le.s32.totalorder 2, %s13
      // Predicated region
      $region33: #{tpu_custom_call.1} parent=5 // pred_check
        %p180 = pneg %p179
      $region34: #{tpu_custom_call.1} parent=5 // pred_check_branch
        %182 = sbr.rel (%p180) target = $region36
      $region35: #{tpu_custom_call.1} parent=5 // pred_region
        %s183 = ssub.s32 %s13, 2
        // Predicated region
        $region37: #{tpu_custom_call.1} parent=35 // pred_check
          %p184 = pneg %p84
        $region38: #{tpu_custom_call.1} parent=35 // pred_check_branch
          %186 = sbr.rel (%p184) target = $region40
        $region39: #{tpu_custom_call.1} parent=35 // pred_region
          %s187 = sand.u32 %s69, 1
          %s188 = scalar_lea.sflag [#allocation4], %s187
          %s189 = sand.u32 %s69, 1
          %s190 = scalar_lea.vmem [#allocation5], %s189
          %191 = dma.done %s188, 16
        $region40: #{tpu_custom_call.1} parent=35 // pred_fallthru
          _
      $region36: #{tpu_custom_call.1} parent=5 // pred_fallthru
        _
    $region6: #{tpu_custom_call.1} parent=1 // loop_footer
      %s17 = sadd.s32 1, %s13
    $region7: #{tpu_custom_call.1} parent=1 // loop_footer_branch
      %12 = sbr.rel target = $region3
    $region8: #{tpu_custom_call.1} parent=1 // loop_exit
      _
    %192 = vsyncpa [#allocation3], 1
    %s193 = scalar_lea.sflag [#allocation3], 1
    %194 = vsyncpa %s193, 1
    %195 = vsyncpa [#allocation4], 1
    %s196 = scalar_lea.sflag [#allocation4], 1
    %197 = vsyncpa %s196, 1

</llo_original>
